<compile_context>
chip_gen: v6e
topology: v6e:2x2x1
jax: 0.10.0
libtpu: 0.0.40
codegen_flags: <defaults>
</compile_context>

<pallas_src>
import jax
import jax.numpy as jnp
from jax.experimental import pallas as pl
from jax.experimental.pallas import tpu as pltpu

_LANE = 128


def _octconv_kernel(x_ref, wh_ref, bh_ref, wl_ref, bl_ref, hf_ref, lf_ref):
    """One fused 1x1-conv tile.

    x_ref : (N, C_in, tile)      activations, pixels on lanes
    wh/bh : (C_out_h, C_in), (C_out_h, 1)   folded high-frequency weights/bias
    wl/bl : (C_out_l, C_in), (C_out_l, 1)   folded low-frequency weights/bias
    hf/lf : (N, C_out_h, tile), (N, C_out_l, tile) outputs
    """
    wh = wh_ref[...]
    bh = bh_ref[...]
    wl = wl_ref[...]
    bl = bl_ref[...]
    n_batch = x_ref.shape[0]
    for n in range(n_batch):                     # tiny static unroll over batch
        x = x_ref[n]                             # (C_in, tile)
        yh = jnp.dot(wh, x, preferred_element_type=jnp.float32) + bh
        yl = jnp.dot(wl, x, preferred_element_type=jnp.float32) + bl
        hf_ref[n] = yh.astype(hf_ref.dtype)
        lf_ref[n] = yl.astype(lf_ref.dtype)


def _pick_tile(HW, tile_hw):
    """Largest lane-aligned pixel tile dividing HW, preferring >=2 tiles (v7x 2 TCs)."""
    if HW % _LANE != 0:
        # Full-extent block is always a legal block dim; avoids pad + slice HBM passes.
        # TODO(synk): very large ragged HW would need an in-kernel masked tail instead.
        return HW, 1
    limit = min(max(tile_hw, _LANE), HW)
    best_any, best_multi = _LANE, None
    t = _LANE
    while t <= limit:
        if HW % t == 0:
            best_any = t
            if HW // t >= 2:
                best_multi = t
        t += _LANE
    tile = best_multi if best_multi is not None else best_any
    return tile, HW // tile


def oct_conv_forward(x_nchw, params, *, tile_hw=8192):
    """Fused OctConv forward.

    x_nchw: (N, C_in_half, H, W) float32 (shared high/low frequency input).
    params: dict branch -> (weight (C_out, C_in, 1, 1), bias (C_out,)) in PyTorch
            Conv2d layout.  Returns (hf_, lf_) in NCHW.
    """
    N, C_in, H, W = x_nchw.shape
    HW = H * W

    # ---- fast-path preconditions (fold is only valid for this configuration) ----
    for name, (w, _) in params.items():
        assert w.shape[2] == 1 and w.shape[3] == 1, f"{name}: kernel_size must be 1"
        assert w.shape[1] == C_in, f"{name}: C_in mismatch"

    # ---- fold the four branch convs into two resident weight matrices ----
    # avg_pool(k=1, s=1) is identity, so H2L sees x; the ill-shaped 2x upsample on
    # L2H is dropped (add at full resolution, paper semantics — see module note).
    def fold(a, b):
        (wa, ba), (wb, bb) = params[a], params[b]
        w = (wa[:, :, 0, 0] + wb[:, :, 0, 0]).astype(jnp.float32)    # (C_out, C_in)
        bias = (ba + bb).astype(jnp.float32).reshape(-1, 1)          # (C_out, 1)
        return w, bias

    w_hf, b_hf = fold("h2h", "l2h")
    w_lf, b_lf = fold("l2l", "h2l")
    c_out_h, c_out_l = w_hf.shape[0], w_lf.shape[0]

    # ---- pixels-on-lanes layout: NCHW -> (N, C, H*W), no transpose needed ----
    x = x_nchw.reshape(N, C_in, HW).astype(jnp.float32)

    tile, num_tiles = _pick_tile(HW, tile_hw)
    grid = (num_tiles,)

    hf, lf = pl.pallas_call(
        _octconv_kernel,
        grid=grid,
        in_specs=[
            pl.BlockSpec((N, C_in, tile), lambda j: (0, 0, j)),      # activations
            pl.BlockSpec((c_out_h, C_in), lambda j: (0, 0)),          # W_hf (resident)
            pl.BlockSpec((c_out_h, 1), lambda j: (0, 0)),             # b_hf
            pl.BlockSpec((c_out_l, C_in), lambda j: (0, 0)),          # W_lf (resident)
            pl.BlockSpec((c_out_l, 1), lambda j: (0, 0)),             # b_lf
        ],
        out_specs=(
            pl.BlockSpec((N, c_out_h, tile), lambda j: (0, 0, j)),    # hf
            pl.BlockSpec((N, c_out_l, tile), lambda j: (0, 0, j)),    # lf
        ),
        out_shape=(
            jax.ShapeDtypeStruct((N, c_out_h, HW), jnp.float32),
            jax.ShapeDtypeStruct((N, c_out_l, HW), jnp.float32),
        ),
        compiler_params=pltpu.CompilerParams(
            dimension_semantics=("parallel",)),
    )(x, w_hf, b_hf, w_lf, b_lf)

    # Pure metadata reshapes — no channel/pixel slicing, no extra HBM pass.
    return hf.reshape(N, c_out_h, H, W), lf.reshape(N, c_out_l, H, W)


def _ref_forward(x_nchw, params):
    """Pure-JAX reference (same full-resolution convention as the kernel)."""
    def conv1x1(x, w, b):
        return jnp.einsum("nchw,oc->nohw", x, w[:, :, 0, 0]) + b[None, :, None, None]

    h2h = conv1x1(x_nchw, *params["h2h"])
    l2h = conv1x1(x_nchw, *params["l2h"])
    l2l = conv1x1(x_nchw, *params["l2l"])
    h2l = conv1x1(x_nchw, *params["h2l"])
    return h2h + l2h, l2l + h2l


def _init_params(key, in_channels=8, out_channels=8, alpha_in=0.5, alpha_out=0.5,
                 kernel_size=1):
    """Deterministic synthetic Conv2d parameters (PyTorch (C_out, C_in, k, k) layout)."""
    c_in_l = int(alpha_in * in_channels)
    c_in_h = in_channels - c_in_l
    c_out_l = int(alpha_out * out_channels)
    c_out_h = out_channels - c_out_l

    shapes = {
        "h2h": (c_out_h, c_in_h),
        "l2h": (c_out_h, c_in_l),
        "l2l": (c_out_l, c_in_l),
        "h2l": (c_out_l, c_in_h),
    }
    params = {}
    for name, (co, ci) in shapes.items():
        key, kw, kb = jax.random.split(key, 3)
        w = 0.1 * jax.random.normal(kw, (co, ci, kernel_size, kernel_size), jnp.float32)
        b = 0.1 * jax.random.normal(kb, (co,), jnp.float32)
        params[name] = (w, b)
    return params


if __name__ == "__main__":
    key = jax.random.PRNGKey(0)
    key, kx = jax.random.split(key)

    # Module config: in_channels=8, out_channels=8, alpha=0.5 -> each conv is 4->4.
    # The reference forward feeds x to both frequency paths, so x carries
    # int(alpha_in * in_channels) = 4 channels.
    N, C, H, W = 2, 4, 16, 16
    x = jax.random.normal(kx, (N, C, H, W), jnp.float32)

    params = _init_params(key, in_channels=8, out_channels=8,
                          alpha_in=0.5, alpha_out=0.5, kernel_size=1)

    hf, lf = oct_conv_forward(x, params)
    jax.block_until_ready((hf, lf))

    hf_ref, lf_ref = _ref_forward(x, params)
    assert hf.shape == (N, 4, H, W) and lf.shape == (N, 4, H, W)
    assert jnp.allclose(hf, hf_ref, rtol=1e-5, atol=1e-5)
    assert jnp.allclose(lf, lf_ref, rtol=1e-5, atol=1e-5)

    print("KERNEL_OK")
</pallas_src>

<mosaic_0001>
module attributes {stable_mosaic.version = 11 : i64} {
  func.func @_octconv_kernel(%arg0: i32, %arg1: memref<2x4x128xf32, #tpu.memory_space<vmem>>, %arg2: memref<4x4xf32, #tpu.memory_space<vmem>>, %arg3: memref<4x1xf32, #tpu.memory_space<vmem>>, %arg4: memref<4x4xf32, #tpu.memory_space<vmem>>, %arg5: memref<4x1xf32, #tpu.memory_space<vmem>>, %arg6: memref<2x4x128xf32, #tpu.memory_space<vmem>>, %arg7: memref<2x4x128xf32, #tpu.memory_space<vmem>>) attributes {dimension_semantics = [#tpu.dimension_semantics<parallel>], iteration_bounds = array<i64: 2>, scalar_prefetch = 0 : i64, scratch_operands = 0 : i64, tpu.core_type = #tpu.core_type<tc>, window_params = [{transform_indices = @transform_0, window_bounds = array<i64: 2, 4, 128>}, {pipeline_mode = #tpu.pipeline_mode<synchronous>, transform_indices = @transform_1, window_bounds = array<i64: 4, 4>}, {pipeline_mode = #tpu.pipeline_mode<synchronous>, transform_indices = @transform_2, window_bounds = array<i64: 4, 1>}, {pipeline_mode = #tpu.pipeline_mode<synchronous>, transform_indices = @transform_3, window_bounds = array<i64: 4, 4>}, {pipeline_mode = #tpu.pipeline_mode<synchronous>, transform_indices = @transform_4, window_bounds = array<i64: 4, 1>}, {transform_indices = @transform_5, window_bounds = array<i64: 2, 4, 128>}, {transform_indices = @transform_6, window_bounds = array<i64: 2, 4, 128>}]} {
    %c0 = arith.constant 0 : index
    %c0_0 = arith.constant 0 : index
    %0 = vector.load %arg2[%c0, %c0_0] : memref<4x4xf32, #tpu.memory_space<vmem>>, vector<4x4xf32>
    %c0_1 = arith.constant 0 : index
    %c0_2 = arith.constant 0 : index
    %1 = vector.load %arg3[%c0_1, %c0_2] : memref<4x1xf32, #tpu.memory_space<vmem>>, vector<4x1xf32>
    %c0_3 = arith.constant 0 : index
    %c0_4 = arith.constant 0 : index
    %2 = vector.load %arg4[%c0_3, %c0_4] : memref<4x4xf32, #tpu.memory_space<vmem>>, vector<4x4xf32>
    %c0_5 = arith.constant 0 : index
    %c0_6 = arith.constant 0 : index
    %3 = vector.load %arg5[%c0_5, %c0_6] : memref<4x1xf32, #tpu.memory_space<vmem>>, vector<4x1xf32>
    %c0_7 = arith.constant 0 : index
    %c0_8 = arith.constant 0 : index
    %c0_9 = arith.constant 0 : index
    %4 = vector.load %arg1[%c0_7, %c0_8, %c0_9] : memref<2x4x128xf32, #tpu.memory_space<vmem>>, vector<1x4x128xf32>
    %5 = vector.shape_cast %4 : vector<1x4x128xf32> to vector<4x128xf32>
    %cst = arith.constant dense<0.000000e+00> : vector<4x128xf32>
    %6 = tpu.matmul %0, %5, %cst {dimension_numbers = #tpu.dot_dimension_numbers<[1], [0], [0], [1], [0, 0, 1, 1], [], []>} : vector<4x4xf32>, vector<4x128xf32>, vector<4x128xf32> -> vector<4x128xf32>
    %7 = vector.broadcast %1 : vector<4x1xf32> to vector<4x128xf32>
    %8 = arith.addf %6, %7 : vector<4x128xf32>
    %cst_10 = arith.constant dense<0.000000e+00> : vector<4x128xf32>
    %9 = tpu.matmul %2, %5, %cst_10 {dimension_numbers = #tpu.dot_dimension_numbers<[1], [0], [0], [1], [0, 0, 1, 1], [], []>} : vector<4x4xf32>, vector<4x128xf32>, vector<4x128xf32> -> vector<4x128xf32>
    %10 = vector.broadcast %3 : vector<4x1xf32> to vector<4x128xf32>
    %11 = arith.addf %9, %10 : vector<4x128xf32>
    %c0_11 = arith.constant 0 : index
    %c0_12 = arith.constant 0 : index
    %c0_13 = arith.constant 0 : index
    %12 = vector.load %arg6[%c0_11, %c0_12, %c0_13] : memref<2x4x128xf32, #tpu.memory_space<vmem>>, vector<1x4x128xf32>
    %13 = vector.shape_cast %12 : vector<1x4x128xf32> to vector<4x128xf32>
    %14 = vector.shape_cast %8 : vector<4x128xf32> to vector<1x4x128xf32>
    tpu.vector_store %arg6[%c0_11, %c0_12, %c0_13], %14 {strides = array<i32>} : memref<2x4x128xf32, #tpu.memory_space<vmem>>, vector<1x4x128xf32>,
    %c0_14 = arith.constant 0 : index
    %c0_15 = arith.constant 0 : index
    %c0_16 = arith.constant 0 : index
    %15 = vector.load %arg7[%c0_14, %c0_15, %c0_16] : memref<2x4x128xf32, #tpu.memory_space<vmem>>, vector<1x4x128xf32>
    %16 = vector.shape_cast %15 : vector<1x4x128xf32> to vector<4x128xf32>
    %17 = vector.shape_cast %11 : vector<4x128xf32> to vector<1x4x128xf32>
    tpu.vector_store %arg7[%c0_14, %c0_15, %c0_16], %17 {strides = array<i32>} : memref<2x4x128xf32, #tpu.memory_space<vmem>>, vector<1x4x128xf32>,
    %c1 = arith.constant 1 : index
    %c0_17 = arith.constant 0 : index
    %c0_18 = arith.constant 0 : index
    %18 = vector.load %arg1[%c1, %c0_17, %c0_18] : memref<2x4x128xf32, #tpu.memory_space<vmem>>, vector<1x4x128xf32>
    %19 = vector.shape_cast %18 : vector<1x4x128xf32> to vector<4x128xf32>
    %cst_19 = arith.constant dense<0.000000e+00> : vector<4x128xf32>
    %20 = tpu.matmul %0, %19, %cst_19 {dimension_numbers = #tpu.dot_dimension_numbers<[1], [0], [0], [1], [0, 0, 1, 1], [], []>} : vector<4x4xf32>, vector<4x128xf32>, vector<4x128xf32> -> vector<4x128xf32>
    %21 = vector.broadcast %1 : vector<4x1xf32> to vector<4x128xf32>
    %22 = arith.addf %20, %21 : vector<4x128xf32>
    %cst_20 = arith.constant dense<0.000000e+00> : vector<4x128xf32>
    %23 = tpu.matmul %2, %19, %cst_20 {dimension_numbers = #tpu.dot_dimension_numbers<[1], [0], [0], [1], [0, 0, 1, 1], [], []>} : vector<4x4xf32>, vector<4x128xf32>, vector<4x128xf32> -> vector<4x128xf32>
    %24 = vector.broadcast %3 : vector<4x1xf32> to vector<4x128xf32>
    %25 = arith.addf %23, %24 : vector<4x128xf32>
    %c1_21 = arith.constant 1 : index
    %c0_22 = arith.constant 0 : index
    %c0_23 = arith.constant 0 : index
    %26 = vector.load %arg6[%c1_21, %c0_22, %c0_23] : memref<2x4x128xf32, #tpu.memory_space<vmem>>, vector<1x4x128xf32>
    %27 = vector.shape_cast %26 : vector<1x4x128xf32> to vector<4x128xf32>
    %28 = vector.shape_cast %22 : vector<4x128xf32> to vector<1x4x128xf32>
    tpu.vector_store %arg6[%c1_21, %c0_22, %c0_23], %28 {strides = array<i32>} : memref<2x4x128xf32, #tpu.memory_space<vmem>>, vector<1x4x128xf32>,
    %c1_24 = arith.constant 1 : index
    %c0_25 = arith.constant 0 : index
    %c0_26 = arith.constant 0 : index
    %29 = vector.load %arg7[%c1_24, %c0_25, %c0_26] : memref<2x4x128xf32, #tpu.memory_space<vmem>>, vector<1x4x128xf32>
    %30 = vector.shape_cast %29 : vector<1x4x128xf32> to vector<4x128xf32>
    %31 = vector.shape_cast %25 : vector<4x128xf32> to vector<1x4x128xf32>
    tpu.vector_store %arg7[%c1_24, %c0_25, %c0_26], %31 {strides = array<i32>} : memref<2x4x128xf32, #tpu.memory_space<vmem>>, vector<1x4x128xf32>,
    return
  }
  func.func @transform_0(%arg0: i32) -> (i32, i32, i32) {
    %c0_i32 = arith.constant 0 : i32
    %c0_i32_0 = arith.constant 0 : i32
    %c0_i32_1 = arith.constant 0 : i32
    return %c0_i32, %c0_i32_0, %arg0 : i32, i32, i32
  }
  func.func @transform_1(%arg0: i32) -> (i32, i32) {
    %c0_i32 = arith.constant 0 : i32
    %c0_i32_0 = arith.constant 0 : i32
    %c0_i32_1 = arith.constant 0 : i32
    return %c0_i32, %c0_i32_0 : i32, i32
  }
  func.func @transform_2(%arg0: i32) -> (i32, i32) {
    %c0_i32 = arith.constant 0 : i32
    %c0_i32_0 = arith.constant 0 : i32
    %c0_i32_1 = arith.constant 0 : i32
    return %c0_i32, %c0_i32_0 : i32, i32
  }
  func.func @transform_3(%arg0: i32) -> (i32, i32) {
    %c0_i32 = arith.constant 0 : i32
    %c0_i32_0 = arith.constant 0 : i32
    %c0_i32_1 = arith.constant 0 : i32
    return %c0_i32, %c0_i32_0 : i32, i32
  }
  func.func @transform_4(%arg0: i32) -> (i32, i32) {
    %c0_i32 = arith.constant 0 : i32
    %c0_i32_0 = arith.constant 0 : i32
    %c0_i32_1 = arith.constant 0 : i32
    return %c0_i32, %c0_i32_0 : i32, i32
  }
  func.func @transform_5(%arg0: i32) -> (i32, i32, i32) {
    %c0_i32 = arith.constant 0 : i32
    %c0_i32_0 = arith.constant 0 : i32
    %c0_i32_1 = arith.constant 0 : i32
    return %c0_i32, %c0_i32_0, %arg0 : i32, i32, i32
  }
  func.func @transform_6(%arg0: i32) -> (i32, i32, i32) {
    %c0_i32 = arith.constant 0 : i32
    %c0_i32_0 = arith.constant 0 : i32
    %c0_i32_1 = arith.constant 0 : i32
    return %c0_i32, %c0_i32_0, %arg0 : i32, i32, i32
  }
}

</mosaic_0001>

<llo_original>
// kernel: tpu_custom_call.1
$region0: #{tpu_custom_call.1}
  #allocation0 [shape = 'u32[]', space=smem, size = 0x4, offset = 0x4, fixed_abs, tag = 'smem constant byte address 0x4 - core index']
  #allocation1 [shape = 'u32[144,128]{1,0:T(1,128)}', space=vmem, size = 0x12000, scoped, tag = 'internal scratch']
  %s0 = inlined_call_operand.hbm [shape: f32[2,4,256], index: 0, kind: input, shape index: {}]
  %s1 = inlined_call_operand.vmem [shape: f32[4,4], index: 1, kind: input, shape index: {}]
  %s2 = inlined_call_operand.vmem [shape: f32[4,1], index: 2, kind: input, shape index: {}]
  %s3 = inlined_call_operand.vmem [shape: f32[4,4], index: 3, kind: input, shape index: {}]
  %s4 = inlined_call_operand.vmem [shape: f32[4,1], index: 4, kind: input, shape index: {}]
  %s5 = inlined_call_operand.hbm [shape: f32[2,4,256], index: 5, kind: output, shape index: {0}]
  %s6 = inlined_call_operand.hbm [shape: f32[2,4,256], index: 6, kind: output, shape index: {1}]
  %7 = xla_tuple %s5, %s6
  %s8 = sld [smem:[#allocation0]]
  $region65: #{tpu_custom_call.1} parent=0
    _
  %s10 = ssub.s32 1, %s8
  %s11 = scalar_select 0, %s10, %s8
  $region1: #{tpu_custom_call.1} parent=0
    #allocation2 [shape = 'u8[8192]{0}', space=vmem, size = 0x2000, scoped, tag = 'input window, operand 0']
    #allocation3 [shape = 's32[2]{0}', space=sflag, size = 0x8, scoped, tag = 'scoped memory for tpu_custom_call.1']
    #allocation4 [shape = 's32[2]{0}', space=sflag, size = 0x8, scoped, tag = 'scoped memory for tpu_custom_call.1']
    #allocation5 [shape = 'u8[8192]{0}', space=vmem, size = 0x2000, scoped, tag = 'output window, operand 0']
    #allocation6 [shape = 'u8[8192]{0}', space=vmem, size = 0x2000, scoped, tag = 'output window, operand 1']
    #allocation7 [shape = 's32[2]{0}', space=sflag, size = 0x8, scoped, tag = 'scoped memory for tpu_custom_call.1']
    %12 = vsyncpa [#allocation3], 0
    %s13 = scalar_lea.sflag [#allocation3], 1
    %14 = vsyncpa %s13, 0
    %15 = vsyncpa [#allocation4], 0
    %s16 = scalar_lea.sflag [#allocation4], 1
    %17 = vsyncpa %s16, 0
    %18 = vsyncpa [#allocation7], 0
    %s19 = scalar_lea.sflag [#allocation7], 1
    %20 = vsyncpa %s19, 0
    loop: start=0, step=1, limit=4
    $region2: #{tpu_custom_call.1} parent=1 // loop_pre_header
      _
    $region3: #{tpu_custom_call.1} parent=1 // loop_header
      %s22 = sphi 0, %s26
      %p23 = scmp.ge.s32.totalorder %s22, 4
      %s32 = sphi 0, %s34
      %s35 = sphi 0, %s32
      %s36 = sphi 0, %s35
      %s52 = sphi 0, %s36
      %s56 = sphi 0, %s56
      %s58 = sphi 0, %s56
      %s59 = sphi 0, %s58
      %s73 = sphi 0, %s59
      %s77 = sphi 0, %s77
      %s79 = sphi 0, %s77
      %s80 = sphi 0, %s79
      %s94 = sphi 0, %s80
      %s98 = sphi 0, %s98
      %s100 = sphi 0, %s98
      %s101 = sphi 0, %s100
      %s115 = sphi 0, %s101
      %s119 = sphi 0, %s119
      %s121 = sphi 0, %s119
      %s122 = sphi 0, %s121
      %s136 = sphi 0, %s122
      %s142 = sphi 0, %s144
      %s145 = sphi 0, %s142
      %s146 = sphi 0, %s145
      %s162 = sphi 0, %s146
      %s168 = sphi 0, %s170
      %s171 = sphi 0, %s168
      %s172 = sphi 0, %s171
      %s188 = sphi 0, %s172
    $region4: #{tpu_custom_call.1} parent=1 // loop_header_branch
      %25 = sbr.rel (%p23) target = $region8
    $region5: #{tpu_custom_call.1} parent=1 // loop_body
      %s27 = ssub.s32 %s22, 1
      %s28 = ssub.s32 %s22, 2
      %s29 = sadd.s32 %s22, 1
      %s30 = ssub.s32 %s22, %s29
      %p31 = scmp.eq.s32.totalorder %s30, 0
      %s33 = sadd.s32 %s32, 1
      %s34 = scalar_select %p31, %s32, %s33
      %p37 = pneg %p31
      %p38 = scmp.eq.s32.totalorder %s22, 1
      %p39 = por %p37, %p38
      %p40 = scmp.ne.s32.totalorder %s32, %s35
      %p41 = scmp.eq.s32.totalorder %s22, 0
      %p42 = por %p40, %p41
      %p43 = scmp.ne.s32.totalorder %s32, %s35
      %p44 = scmp.eq.s32.totalorder %s27, 1
      %p45 = por %p43, %p44
      %p46 = scmp.ne.s32.totalorder %s35, %s36
      %p47 = scmp.eq.s32.totalorder %s27, 0
      %p48 = por %p46, %p47
      %p49 = scmp.ne.s32.totalorder %s35, %s36
      %p50 = scmp.eq.s32.totalorder %s28, 1
      %p51 = por %p49, %p50
      %p53 = scmp.ne.s32.totalorder %s36, %s52
      %p54 = scmp.eq.s32.totalorder %s28, 0
      %p55 = por %p53, %p54
      %s57 = sadd.s32 %s56, 1
      %p60 = scmp.eq.s32.totalorder %s22, 1
      %p61 = scmp.ne.s32.totalorder %s56, %s58
      %p62 = scmp.eq.s32.totalorder %s22, 0
      %p63 = por %p61, %p62
      %p64 = scmp.ne.s32.totalorder %s56, %s58
      %p65 = scmp.eq.s32.totalorder %s27, 1
      %p66 = por %p64, %p65
      %p67 = scmp.ne.s32.totalorder %s58, %s59
      %p68 = scmp.eq.s32.totalorder %s27, 0
      %p69 = por %p67, %p68
      %p70 = scmp.ne.s32.totalorder %s58, %s59
      %p71 = scmp.eq.s32.totalorder %s28, 1
      %p72 = por %p70, %p71
      %p74 = scmp.ne.s32.totalorder %s59, %s73
      %p75 = scmp.eq.s32.totalorder %s28, 0
      %p76 = por %p74, %p75
      %s78 = sadd.s32 %s77, 1
      %p81 = scmp.eq.s32.totalorder %s22, 1
      %p82 = scmp.ne.s32.totalorder %s77, %s79
      %p83 = scmp.eq.s32.totalorder %s22, 0
      %p84 = por %p82, %p83
      %p85 = scmp.ne.s32.totalorder %s77, %s79
      %p86 = scmp.eq.s32.totalorder %s27, 1
      %p87 = por %p85, %p86
      %p88 = scmp.ne.s32.totalorder %s79, %s80
      %p89 = scmp.eq.s32.totalorder %s27, 0
      %p90 = por %p88, %p89
      %p91 = scmp.ne.s32.totalorder %s79, %s80
      %p92 = scmp.eq.s32.totalorder %s28, 1
      %p93 = por %p91, %p92
      %p95 = scmp.ne.s32.totalorder %s80, %s94
      %p96 = scmp.eq.s32.totalorder %s28, 0
      %p97 = por %p95, %p96
      %s99 = sadd.s32 %s98, 1
      %p102 = scmp.eq.s32.totalorder %s22, 1
      %p103 = scmp.ne.s32.totalorder %s98, %s100
      %p104 = scmp.eq.s32.totalorder %s22, 0
      %p105 = por %p103, %p104
      %p106 = scmp.ne.s32.totalorder %s98, %s100
      %p107 = scmp.eq.s32.totalorder %s27, 1
      %p108 = por %p106, %p107
      %p109 = scmp.ne.s32.totalorder %s100, %s101
      %p110 = scmp.eq.s32.totalorder %s27, 0
      %p111 = por %p109, %p110
      %p112 = scmp.ne.s32.totalorder %s100, %s101
      %p113 = scmp.eq.s32.totalorder %s28, 1
      %p114 = por %p112, %p113
      %p116 = scmp.ne.s32.totalorder %s101, %s115
      %p117 = scmp.eq.s32.totalorder %s28, 0
      %p118 = por %p116, %p117
      %s120 = sadd.s32 %s119, 1
      %p123 = scmp.eq.s32.totalorder %s22, 1
      %p124 = scmp.ne.s32.totalorder %s119, %s121
      %p125 = scmp.eq.s32.totalorder %s22, 0
      %p126 = por %p124, %p125
      %p127 = scmp.ne.s32.totalorder %s119, %s121
      %p128 = scmp.eq.s32.totalorder %s27, 1
      %p129 = por %p127, %p128
      %p130 = scmp.ne.s32.totalorder %s121, %s122
      %p131 = scmp.eq.s32.totalorder %s27, 0
      %p132 = por %p130, %p131
      %p133 = scmp.ne.s32.totalorder %s121, %s122
      %p134 = scmp.eq.s32.totalorder %s28, 1
      %p135 = por %p133, %p134
      %p137 = scmp.ne.s32.totalorder %s122, %s136
      %p138 = scmp.eq.s32.totalorder %s28, 0
      %p139 = por %p137, %p138
      %s140 = ssub.s32 %s22, %s29
      %p141 = scmp.eq.s32.totalorder %s140, 0
      %s143 = sadd.s32 %s142, 1
      %s144 = scalar_select %p141, %s142, %s143
      %p147 = pneg %p141
      %p148 = scmp.eq.s32.totalorder %s22, 1
      %p149 = por %p147, %p148
      %p150 = scmp.ne.s32.totalorder %s142, %s145
      %p151 = scmp.eq.s32.totalorder %s22, 0
      %p152 = por %p150, %p151
      %p153 = scmp.ne.s32.totalorder %s142, %s145
      %p154 = scmp.eq.s32.totalorder %s27, 1
      %p155 = por %p153, %p154
      %p156 = scmp.ne.s32.totalorder %s145, %s146
      %p157 = scmp.eq.s32.totalorder %s27, 0
      %p158 = por %p156, %p157
      %p159 = scmp.ne.s32.totalorder %s145, %s146
      %p160 = scmp.eq.s32.totalorder %s28, 1
      %p161 = por %p159, %p160
      %p163 = scmp.ne.s32.totalorder %s146, %s162
      %p164 = scmp.eq.s32.totalorder %s28, 0
      %p165 = por %p163, %p164
      %s166 = ssub.s32 %s22, %s29
      %p167 = scmp.eq.s32.totalorder %s166, 0
      %s169 = sadd.s32 %s168, 1
      %s170 = scalar_select %p167, %s168, %s169
      %p173 = pneg %p167
      %p174 = scmp.eq.s32.totalorder %s22, 1
      %p175 = por %p173, %p174
      %p176 = scmp.ne.s32.totalorder %s168, %s171
      %p177 = scmp.eq.s32.totalorder %s22, 0
      %p178 = por %p176, %p177
      %p179 = scmp.ne.s32.totalorder %s168, %s171
      %p180 = scmp.eq.s32.totalorder %s27, 1
      %p181 = por %p179, %p180
      %p182 = scmp.ne.s32.totalorder %s171, %s172
      %p183 = scmp.eq.s32.totalorder %s27, 0
      %p184 = por %p182, %p183
      %p185 = scmp.ne.s32.totalorder %s171, %s172
      %p186 = scmp.eq.s32.totalorder %s28, 1
      %p187 = por %p185, %p186
      %p189 = scmp.ne.s32.totalorder %s172, %s188
      %p190 = scmp.eq.s32.totalorder %s28, 0
      %p191 = por %p189, %p190
      %p192 = scmp.le.s32.totalorder 1, %s22
      %p193 = scmp.lt.s32.totalorder %s22, 3
      %p194 = pnand %p192, %p193
      %p195 = pneg %p194
      // Predicated region
      $region9: #{tpu_custom_call.1} parent=5 // pred_check
        _
      $region10: #{tpu_custom_call.1} parent=5 // pred_check_branch
        %197 = sbr.rel (%p194) target = $region12
      $region11: #{tpu_custom_call.1} parent=5 // pred_region
        %s198 = ssub.s32 %s22, 1
        // Predicated region
        $region13: #{tpu_custom_call.1} parent=11 // pred_check
          %p199 = pneg %p69
        $region14: #{tpu_custom_call.1} parent=11 // pred_check_branch
          %201 = sbr.rel (%p199) target = $region16
        $region15: #{tpu_custom_call.1} parent=11 // pred_region
          _
        $region16: #{tpu_custom_call.1} parent=11 // pred_fallthru
          _
        // Predicated region
        $region17: #{tpu_custom_call.1} parent=11 // pred_check
          %p202 = pneg %p90
        $region18: #{tpu_custom_call.1} parent=11 // pred_check_branch
          %204 = sbr.rel (%p202) target = $region20
        $region19: #{tpu_custom_call.1} parent=11 // pred_region
          _
        $region20: #{tpu_custom_call.1} parent=11 // pred_fallthru
          _
        // Predicated region
        $region21: #{tpu_custom_call.1} parent=11 // pred_check
          %p205 = pneg %p111
        $region22: #{tpu_custom_call.1} parent=11 // pred_check_branch
          %207 = sbr.rel (%p205) target = $region24
        $region23: #{tpu_custom_call.1} parent=11 // pred_region
          _
        $region24: #{tpu_custom_call.1} parent=11 // pred_fallthru
          _
        // Predicated region
        $region25: #{tpu_custom_call.1} parent=11 // pred_check
          %p208 = pneg %p132
        $region26: #{tpu_custom_call.1} parent=11 // pred_check_branch
          %210 = sbr.rel (%p208) target = $region28
        $region27: #{tpu_custom_call.1} parent=11 // pred_region
          _
        $region28: #{tpu_custom_call.1} parent=11 // pred_fallthru
          _
      $region12: #{tpu_custom_call.1} parent=5 // pred_fallthru
        _
      %p211 = scmp.lt.s32.totalorder %s22, 2
      // Predicated region
      $region29: #{tpu_custom_call.1} parent=5 // pred_check
        %p212 = pneg %p211
      $region30: #{tpu_custom_call.1} parent=5 // pred_check_branch
        %214 = sbr.rel (%p212) target = $region32
      $region31: #{tpu_custom_call.1} parent=5 // pred_region
        // Predicated region
        $region33: #{tpu_custom_call.1} parent=31 // pred_check
          %p215 = pneg %p42
        $region34: #{tpu_custom_call.1} parent=31 // pred_check_branch
          %217 = sbr.rel (%p215) target = $region36
        $region35: #{tpu_custom_call.1} parent=31 // pred_region
          %s218 = sand.u32 %s32, 1
          %s219 = scalar_lea.sflag [#allocation3], %s218
          %s220 = sand.u32 %s32, 1
          %s221 = smul.addr %s220, 8
          %s222 = scalar_lea.vmem [#allocation2], %s221
          %s224 = ssub.s32 128, 128
          %225 = vsyncadd %s219, %s224
          %s226 = smul.addr %s22, 64
          %s227 = scalar_lea.hbm %s0, %s226
          %s228 = sshll.u32 %s222, 4
          %s229 = int_to_ptr.vmem [resolvable:$true] %s228
          %234 = dma.hbm_to_vmem [thread:$0]  %s227, 128, %s229, %s219, 128, 64, 4
        $region36: #{tpu_custom_call.1} parent=31 // pred_fallthru
          _
      $region32: #{tpu_custom_call.1} parent=5 // pred_fallthru
        _
      %p235 = scmp.le.s32.totalorder 1, %s22
      %p236 = scmp.lt.s32.totalorder %s22, 3
      %p237 = pnand %p235, %p236
      %p238 = pneg %p237
      // Predicated region
      $region37: #{tpu_custom_call.1} parent=5 // pred_check
        _
      $region38: #{tpu_custom_call.1} parent=5 // pred_check_branch
        %240 = sbr.rel (%p237) target = $region40
      $region39: #{tpu_custom_call.1} parent=5 // pred_region
        %s241 = ssub.s32 %s22, 1
        %s242 = sand.u32 %s35, 1
        %s243 = scalar_lea.sflag [#allocation3], %s242
        %s244 = sand.u32 %s35, 1
        %s245 = smul.addr %s244, 8
        %s246 = scalar_lea.vmem [#allocation2], %s245
        // Predicated region
        $region41: #{tpu_custom_call.1} parent=39 // pred_check
          %p247 = pneg %p48
        $region42: #{tpu_custom_call.1} parent=39 // pred_check_branch
          %249 = sbr.rel (%p247) target = $region44
        $region43: #{tpu_custom_call.1} parent=39 // pred_region
          %250 = dma.done %s243, 128
        $region44: #{tpu_custom_call.1} parent=39 // pred_fallthru
          _
        %s251 = sand.u32 %s35, 1
        %s252 = scalar_lea.sflag [#allocation3], %s251
        %s253 = sand.u32 %s35, 1
        %s254 = smul.addr %s253, 8
        %s255 = scalar_lea.vmem [#allocation2], %s254
        %p256 = pneg %p48
        %p257 = pneg %p45
        %p258 = pneg %p69
        %p259 = pneg %p66
        %p260 = pneg %p90
        %p261 = pneg %p87
        %p262 = pneg %p111
        %p263 = pneg %p108
        %p264 = pneg %p132
        %p265 = pneg %p129
        %p266 = pneg %p158
        %p267 = pneg %p155
        %s268 = sand.u32 %s145, 1
        %s269 = scalar_lea.sflag [#allocation4], %s268
        %s270 = sand.u32 %s145, 1
        %s271 = smul.addr %s270, 8
        %s272 = scalar_lea.vmem [#allocation5], %s271
        %p273 = pneg %p184
        %p274 = pneg %p181
        %s275 = sand.u32 %s171, 1
        %s276 = scalar_lea.sflag [#allocation7], %s275
        %s277 = sand.u32 %s171, 1
        %s278 = smul.addr %s277, 8
        %s279 = scalar_lea.vmem [#allocation6], %s278
        %v280 = vld [vmem:[%s1] sm:$0xf]
        %v281 = vld [vmem:[%s2] sm:$0xf]
        %v282 = vld [vmem:[%s3] sm:$0xf]
        %v283 = vld [vmem:[%s4] sm:$0xf]
        %v284 = vld [vmem:[%s246] sm:$0xf]
        %286 = vset.pattern.permute.xlu0 0
        %287 = vperm.xlu0 %286, %v281
        %v288 = vpop.permute.xlu0 %287
        %vm290 = vcmask 31744
        %v292 = vsel %vm290, %v280, 0
        %vm294 = vcmask 1043456
        %v296 = vsel %vm294, %v284, 0
        %298 = vmatprep.subr.mxu0 0.0
        %299 = vmatpush1.msra.mxu0 0.0
        %300 = vmatprep.subr.mxu0 0.0
        %301 = vmatpush1.msra.mxu0 0.0
        %302 = vmatprep.subr.mxu0 0.0
        %303 = vmatpush1.msra.mxu0 0.0
        %304 = vmatprep.subr.mxu0 0.0
        %305 = vmatpush1.msra.mxu0 0.0
        %306 = vmatprep.subr.mxu0 0.0
        %307 = vmatpush1.msra.mxu0 0.0
        %308 = vmatprep.subr.mxu0 0.0
        %309 = vmatpush1.msra.mxu0 0.0
        %310 = vmatprep.subr.mxu0 0.0
        %311 = vmatpush1.msra.mxu0 0.0
        %312 = vmatprep.subr.mxu0 0.0
        %313 = vmatpush1.msra.mxu0 0.0
        %314 = vmatprep.subr.mxu0 0.0
        %315 = vmatpush1.msra.mxu0 0.0
        %316 = vmatprep.subr.mxu0 0.0
        %317 = vmatpush1.msra.mxu0 0.0
        %318 = vmatprep.subr.mxu0 0.0
        %319 = vmatpush1.msra.mxu0 0.0
        %320 = vmatprep.subr.mxu0 0.0
        %321 = vmatpush1.msra.mxu0 0.0
        %322 = vmatprep.subr.mxu0 0.0
        %323 = vmatpush1.msra.mxu0 0.0
        %324 = vmatprep.subr.mxu0 0.0
        %325 = vmatpush1.msra.mxu0 0.0
        %326 = vmatprep.subr.mxu0 0.0
        %327 = vmatpush1.msra.mxu0 0.0
        %328 = vmatprep.subr.mxu0 0.0
        %329 = vmatpush1.msra.mxu0 %v296
        %330 = vmatprep.subr.mxu0 0.0
        %331 = vmatpush2.msra.mxu0 0.0
        %332 = vmatprep.subr.mxu0 0.0
        %333 = vmatpush2.msra.mxu0 0.0
        %334 = vmatprep.subr.mxu0 0.0
        %335 = vmatpush2.msra.mxu0 0.0
        %336 = vmatprep.subr.mxu0 0.0
        %337 = vmatpush2.msra.mxu0 0.0
        %338 = vmatprep.subr.mxu0 0.0
        %339 = vmatpush2.msra.mxu0 0.0
        %340 = vmatprep.subr.mxu0 0.0
        %341 = vmatpush2.msra.mxu0 0.0
        %342 = vmatprep.subr.mxu0 0.0
        %343 = vmatpush2.msra.mxu0 0.0
        %344 = vmatprep.subr.mxu0 0.0
        %345 = vmatpush2.msra.mxu0 0.0
        %346 = vmatprep.subr.mxu0 0.0
        %347 = vmatpush2.msra.mxu0 0.0
        %348 = vmatprep.subr.mxu0 0.0
        %349 = vmatpush2.msra.mxu0 0.0
        %350 = vmatprep.subr.mxu0 0.0
        %351 = vmatpush2.msra.mxu0 0.0
        %352 = vmatprep.subr.mxu0 0.0
        %353 = vmatpush2.msra.mxu0 0.0
        %354 = vmatprep.subr.mxu0 0.0
        %355 = vmatpush2.msra.mxu0 0.0
        %356 = vmatprep.subr.mxu0 0.0
        %357 = vmatpush2.msra.mxu0 0.0
        %358 = vmatprep.subr.mxu0 0.0
        %359 = vmatpush2.msra.mxu0 0.0
        %360 = vmatprep.subr.mxu0 0.0
        %361 = vmatpush2.msra.mxu0 0.0
        %362 = vmatprep.mubr.f32.mxu0 0.0
        %363 = vmatmul.mubr.f32.gmra.mxu0 %v292
        %v364 = vpop.f32.mrf.mxu0
        %v365 = vadd.f32 %v288, %v364
        %v366 = vpop.f32.mrf.mxu0
        %367 = vdwg.mxu0
        %369 = vset.pattern.permute.xlu0 0
        %370 = vperm.xlu0 %369, %v283
        %v371 = vpop.permute.xlu0 %370
        %v374 = vsel %vm290, %v282, 0
        %376 = vmatprep.subr.mxu0 0.0
        %377 = vmatpush1.msra.mxu0 0.0
        %378 = vmatprep.subr.mxu0 0.0
        %379 = vmatpush1.msra.mxu0 0.0
        %380 = vmatprep.subr.mxu0 0.0
        %381 = vmatpush1.msra.mxu0 0.0
        %382 = vmatprep.subr.mxu0 0.0
        %383 = vmatpush1.msra.mxu0 0.0
        %384 = vmatprep.subr.mxu0 0.0
        %385 = vmatpush1.msra.mxu0 0.0
        %386 = vmatprep.subr.mxu0 0.0
        %387 = vmatpush1.msra.mxu0 0.0
        %388 = vmatprep.subr.mxu0 0.0
        %389 = vmatpush1.msra.mxu0 0.0
        %390 = vmatprep.subr.mxu0 0.0
        %391 = vmatpush1.msra.mxu0 0.0
        %392 = vmatprep.subr.mxu0 0.0
        %393 = vmatpush1.msra.mxu0 0.0
        %394 = vmatprep.subr.mxu0 0.0
        %395 = vmatpush1.msra.mxu0 0.0
        %396 = vmatprep.subr.mxu0 0.0
        %397 = vmatpush1.msra.mxu0 0.0
        %398 = vmatprep.subr.mxu0 0.0
        %399 = vmatpush1.msra.mxu0 0.0
        %400 = vmatprep.subr.mxu0 0.0
        %401 = vmatpush1.msra.mxu0 0.0
        %402 = vmatprep.subr.mxu0 0.0
        %403 = vmatpush1.msra.mxu0 0.0
        %404 = vmatprep.subr.mxu0 0.0
        %405 = vmatpush1.msra.mxu0 0.0
        %406 = vmatprep.subr.mxu0 0.0
        %407 = vmatpush1.msra.mxu0 %v296
        %408 = vmatprep.subr.mxu0 0.0
        %409 = vmatpush2.msra.mxu0 0.0
        %410 = vmatprep.subr.mxu0 0.0
        %411 = vmatpush2.msra.mxu0 0.0
        %412 = vmatprep.subr.mxu0 0.0
        %413 = vmatpush2.msra.mxu0 0.0
        %414 = vmatprep.subr.mxu0 0.0
        %415 = vmatpush2.msra.mxu0 0.0
        %416 = vmatprep.subr.mxu0 0.0
        %417 = vmatpush2.msra.mxu0 0.0
        %418 = vmatprep.subr.mxu0 0.0
        %419 = vmatpush2.msra.mxu0 0.0
        %420 = vmatprep.subr.mxu0 0.0
        %421 = vmatpush2.msra.mxu0 0.0
        %422 = vmatprep.subr.mxu0 0.0
        %423 = vmatpush2.msra.mxu0 0.0
        %424 = vmatprep.subr.mxu0 0.0
        %425 = vmatpush2.msra.mxu0 0.0
        %426 = vmatprep.subr.mxu0 0.0
        %427 = vmatpush2.msra.mxu0 0.0
        %428 = vmatprep.subr.mxu0 0.0
        %429 = vmatpush2.msra.mxu0 0.0
        %430 = vmatprep.subr.mxu0 0.0
        %431 = vmatpush2.msra.mxu0 0.0
        %432 = vmatprep.subr.mxu0 0.0
        %433 = vmatpush2.msra.mxu0 0.0
        %434 = vmatprep.subr.mxu0 0.0
        %435 = vmatpush2.msra.mxu0 0.0
        %436 = vmatprep.subr.mxu0 0.0
        %437 = vmatpush2.msra.mxu0 0.0
        %438 = vmatprep.subr.mxu0 0.0
        %439 = vmatpush2.msra.mxu0 0.0
        %440 = vmatprep.mubr.f32.mxu0 0.0
        %441 = vmatmul.mubr.f32.gmra.mxu0 %v374
        %v442 = vpop.f32.mrf.mxu0
        %v443 = vadd.f32 %v371, %v442
        %v444 = vpop.f32.mrf.mxu0
        %445 = vdwg.mxu0
        %446 = vst [vmem:[%s272] sm:$0xf] %v365
        %447 = vst [vmem:[%s279] sm:$0xf] %v443
        %s448 = scalar_lea.vmem %s246, 4 [#allocation2]
        %v449 = vld [vmem:[%s448] sm:$0xf]
        %v451 = vsel %vm294, %v449, 0
        %453 = vmatprep.subr.mxu0 0.0
        %454 = vmatpush1.msra.mxu0 0.0
        %455 = vmatprep.subr.mxu0 0.0
        %456 = vmatpush1.msra.mxu0 0.0
        %457 = vmatprep.subr.mxu0 0.0
        %458 = vmatpush1.msra.mxu0 0.0
        %459 = vmatprep.subr.mxu0 0.0
        %460 = vmatpush1.msra.mxu0 0.0
        %461 = vmatprep.subr.mxu0 0.0
        %462 = vmatpush1.msra.mxu0 0.0
        %463 = vmatprep.subr.mxu0 0.0
        %464 = vmatpush1.msra.mxu0 0.0
        %465 = vmatprep.subr.mxu0 0.0
        %466 = vmatpush1.msra.mxu0 0.0
        %467 = vmatprep.subr.mxu0 0.0
        %468 = vmatpush1.msra.mxu0 0.0
        %469 = vmatprep.subr.mxu0 0.0
        %470 = vmatpush1.msra.mxu0 0.0
        %471 = vmatprep.subr.mxu0 0.0
        %472 = vmatpush1.msra.mxu0 0.0
        %473 = vmatprep.subr.mxu0 0.0
        %474 = vmatpush1.msra.mxu0 0.0
        %475 = vmatprep.subr.mxu0 0.0
        %476 = vmatpush1.msra.mxu0 0.0
        %477 = vmatprep.subr.mxu0 0.0
        %478 = vmatpush1.msra.mxu0 0.0
        %479 = vmatprep.subr.mxu0 0.0
        %480 = vmatpush1.msra.mxu0 0.0
        %481 = vmatprep.subr.mxu0 0.0
        %482 = vmatpush1.msra.mxu0 0.0
        %483 = vmatprep.subr.mxu0 0.0
        %484 = vmatpush1.msra.mxu0 %v451
        %485 = vmatprep.subr.mxu0 0.0
        %486 = vmatpush2.msra.mxu0 0.0
        %487 = vmatprep.subr.mxu0 0.0
        %488 = vmatpush2.msra.mxu0 0.0
        %489 = vmatprep.subr.mxu0 0.0
        %490 = vmatpush2.msra.mxu0 0.0
        %491 = vmatprep.subr.mxu0 0.0
        %492 = vmatpush2.msra.mxu0 0.0
        %493 = vmatprep.subr.mxu0 0.0
        %494 = vmatpush2.msra.mxu0 0.0
        %495 = vmatprep.subr.mxu0 0.0
        %496 = vmatpush2.msra.mxu0 0.0
        %497 = vmatprep.subr.mxu0 0.0
        %498 = vmatpush2.msra.mxu0 0.0
        %499 = vmatprep.subr.mxu0 0.0
        %500 = vmatpush2.msra.mxu0 0.0
        %501 = vmatprep.subr.mxu0 0.0
        %502 = vmatpush2.msra.mxu0 0.0
        %503 = vmatprep.subr.mxu0 0.0
        %504 = vmatpush2.msra.mxu0 0.0
        %505 = vmatprep.subr.mxu0 0.0
        %506 = vmatpush2.msra.mxu0 0.0
        %507 = vmatprep.subr.mxu0 0.0
        %508 = vmatpush2.msra.mxu0 0.0
        %509 = vmatprep.subr.mxu0 0.0
        %510 = vmatpush2.msra.mxu0 0.0
        %511 = vmatprep.subr.mxu0 0.0
        %512 = vmatpush2.msra.mxu0 0.0
        %513 = vmatprep.subr.mxu0 0.0
        %514 = vmatpush2.msra.mxu0 0.0
        %515 = vmatprep.subr.mxu0 0.0
        %516 = vmatpush2.msra.mxu0 0.0
        %517 = vmatprep.mubr.f32.mxu0 0.0
        %518 = vmatmul.mubr.f32.gmra.mxu0 %v292
        %v519 = vpop.f32.mrf.mxu0
        %v520 = vadd.f32 %v288, %v519
        %v521 = vpop.f32.mrf.mxu0
        %522 = vdwg.mxu0
        %523 = vmatprep.subr.mxu0 0.0
        %524 = vmatpush1.msra.mxu0 0.0
        %525 = vmatprep.subr.mxu0 0.0
        %526 = vmatpush1.msra.mxu0 0.0
        %527 = vmatprep.subr.mxu0 0.0
        %528 = vmatpush1.msra.mxu0 0.0
        %529 = vmatprep.subr.mxu0 0.0
        %530 = vmatpush1.msra.mxu0 0.0
        %531 = vmatprep.subr.mxu0 0.0
        %532 = vmatpush1.msra.mxu0 0.0
        %533 = vmatprep.subr.mxu0 0.0
        %534 = vmatpush1.msra.mxu0 0.0
        %535 = vmatprep.subr.mxu0 0.0
        %536 = vmatpush1.msra.mxu0 0.0
        %537 = vmatprep.subr.mxu0 0.0
        %538 = vmatpush1.msra.mxu0 0.0
        %539 = vmatprep.subr.mxu0 0.0
        %540 = vmatpush1.msra.mxu0 0.0
        %541 = vmatprep.subr.mxu0 0.0
        %542 = vmatpush1.msra.mxu0 0.0
        %543 = vmatprep.subr.mxu0 0.0
        %544 = vmatpush1.msra.mxu0 0.0
        %545 = vmatprep.subr.mxu0 0.0
        %546 = vmatpush1.msra.mxu0 0.0
        %547 = vmatprep.subr.mxu0 0.0
        %548 = vmatpush1.msra.mxu0 0.0
        %549 = vmatprep.subr.mxu0 0.0
        %550 = vmatpush1.msra.mxu0 0.0
        %551 = vmatprep.subr.mxu0 0.0
        %552 = vmatpush1.msra.mxu0 0.0
        %553 = vmatprep.subr.mxu0 0.0
        %554 = vmatpush1.msra.mxu0 %v451
        %555 = vmatprep.subr.mxu0 0.0
        %556 = vmatpush2.msra.mxu0 0.0
        %557 = vmatprep.subr.mxu0 0.0
        %558 = vmatpush2.msra.mxu0 0.0
        %559 = vmatprep.subr.mxu0 0.0
        %560 = vmatpush2.msra.mxu0 0.0
        %561 = vmatprep.subr.mxu0 0.0
        %562 = vmatpush2.msra.mxu0 0.0
        %563 = vmatprep.subr.mxu0 0.0
        %564 = vmatpush2.msra.mxu0 0.0
        %565 = vmatprep.subr.mxu0 0.0
        %566 = vmatpush2.msra.mxu0 0.0
        %567 = vmatprep.subr.mxu0 0.0
        %568 = vmatpush2.msra.mxu0 0.0
        %569 = vmatprep.subr.mxu0 0.0
        %570 = vmatpush2.msra.mxu0 0.0
        %571 = vmatprep.subr.mxu0 0.0
        %572 = vmatpush2.msra.mxu0 0.0
        %573 = vmatprep.subr.mxu0 0.0
        %574 = vmatpush2.msra.mxu0 0.0
        %575 = vmatprep.subr.mxu0 0.0
        %576 = vmatpush2.msra.mxu0 0.0
        %577 = vmatprep.subr.mxu0 0.0
        %578 = vmatpush2.msra.mxu0 0.0
        %579 = vmatprep.subr.mxu0 0.0
        %580 = vmatpush2.msra.mxu0 0.0
        %581 = vmatprep.subr.mxu0 0.0
        %582 = vmatpush2.msra.mxu0 0.0
        %583 = vmatprep.subr.mxu0 0.0
        %584 = vmatpush2.msra.mxu0 0.0
        %585 = vmatprep.subr.mxu0 0.0
        %586 = vmatpush2.msra.mxu0 0.0
        %587 = vmatprep.mubr.f32.mxu0 0.0
        %588 = vmatmul.mubr.f32.gmra.mxu0 %v374
        %v589 = vpop.f32.mrf.mxu0
        %v590 = vadd.f32 %v371, %v589
        %v591 = vpop.f32.mrf.mxu0
        %592 = vdwg.mxu0
        %s593 = scalar_lea.vmem %s272, 4 [#allocation5]
        %594 = vst [vmem:[%s593] sm:$0xf] %v520
        %s595 = scalar_lea.vmem %s279, 4 [#allocation6]
        %596 = vst [vmem:[%s595] sm:$0xf] %v590
        %s597 = sand.u32 %s145, 1
        %s598 = scalar_lea.sflag [#allocation4], %s597
        %s599 = sand.u32 %s145, 1
        %s600 = smul.addr %s599, 8
        %s601 = scalar_lea.vmem [#allocation5], %s600
        %s602 = sand.u32 %s171, 1
        %s603 = scalar_lea.sflag [#allocation7], %s602
        %s604 = sand.u32 %s171, 1
        %s605 = smul.addr %s604, 8
        %s606 = scalar_lea.vmem [#allocation6], %s605
        // Predicated region
        $region45: #{tpu_custom_call.1} parent=39 // pred_check
          %p607 = pneg %p155
        $region46: #{tpu_custom_call.1} parent=39 // pred_check_branch
          %609 = sbr.rel (%p607) target = $region48
        $region47: #{tpu_custom_call.1} parent=39 // pred_region
          %s611 = ssub.s32 128, 128
          %612 = vsyncadd %s598, %s611
          %s613 = smul.addr %s27, 64
          %s614 = scalar_lea.hbm %s5, %s613
          %s615 = sshll.u32 %s601, 4
          %s616 = int_to_ptr.vmem [resolvable:$true] %s615
          %621 = dma.vmem_to_hbm [thread:$0]  %s616, 128, %s614, %s598, 64, 128, 4
        $region48: #{tpu_custom_call.1} parent=39 // pred_fallthru
          _
        // Predicated region
        $region49: #{tpu_custom_call.1} parent=39 // pred_check
          %p622 = pneg %p181
        $region50: #{tpu_custom_call.1} parent=39 // pred_check_branch
          %624 = sbr.rel (%p622) target = $region52
        $region51: #{tpu_custom_call.1} parent=39 // pred_region
          %s626 = ssub.s32 128, 128
          %627 = vsyncadd %s603, %s626
          %s628 = smul.addr %s27, 64
          %s629 = scalar_lea.hbm %s6, %s628
          %s630 = sshll.u32 %s606, 4
          %s631 = int_to_ptr.vmem [resolvable:$true] %s630
          %636 = dma.vmem_to_hbm [thread:$0]  %s631, 128, %s629, %s603, 64, 128, 4
        $region52: #{tpu_custom_call.1} parent=39 // pred_fallthru
          _
      $region40: #{tpu_custom_call.1} parent=5 // pred_fallthru
        _
      %p637 = scmp.le.s32.totalorder 2, %s22
      // Predicated region
      $region53: #{tpu_custom_call.1} parent=5 // pred_check
        %p638 = pneg %p637
      $region54: #{tpu_custom_call.1} parent=5 // pred_check_branch
        %640 = sbr.rel (%p638) target = $region56
      $region55: #{tpu_custom_call.1} parent=5 // pred_region
        %s641 = ssub.s32 %s22, 2
        // Predicated region
        $region57: #{tpu_custom_call.1} parent=55 // pred_check
          %p642 = pneg %p161
        $region58: #{tpu_custom_call.1} parent=55 // pred_check_branch
          %644 = sbr.rel (%p642) target = $region60
        $region59: #{tpu_custom_call.1} parent=55 // pred_region
          %s645 = sand.u32 %s146, 1
          %s646 = scalar_lea.sflag [#allocation4], %s645
          %s647 = sand.u32 %s146, 1
          %s648 = smul.addr %s647, 8
          %s649 = scalar_lea.vmem [#allocation5], %s648
          %650 = dma.done %s646, 128
        $region60: #{tpu_custom_call.1} parent=55 // pred_fallthru
          _
        // Predicated region
        $region61: #{tpu_custom_call.1} parent=55 // pred_check
          %p651 = pneg %p187
        $region62: #{tpu_custom_call.1} parent=55 // pred_check_branch
          %653 = sbr.rel (%p651) target = $region64
        $region63: #{tpu_custom_call.1} parent=55 // pred_region
          %s654 = sand.u32 %s172, 1
          %s655 = scalar_lea.sflag [#allocation7], %s654
          %s656 = sand.u32 %s172, 1
          %s657 = smul.addr %s656, 8
          %s658 = scalar_lea.vmem [#allocation6], %s657
          %659 = dma.done %s655, 128
        $region64: #{tpu_custom_call.1} parent=55 // pred_fallthru
          _
      $region56: #{tpu_custom_call.1} parent=5 // pred_fallthru
        _
    $region6: #{tpu_custom_call.1} parent=1 // loop_footer
      %s26 = sadd.s32 1, %s22
    $region7: #{tpu_custom_call.1} parent=1 // loop_footer_branch
      %21 = sbr.rel target = $region3
    $region8: #{tpu_custom_call.1} parent=1 // loop_exit
      _
    %660 = vsyncpa [#allocation3], 1
    %s661 = scalar_lea.sflag [#allocation3], 1
    %662 = vsyncpa %s661, 1
    %663 = vsyncpa [#allocation4], 1
    %s664 = scalar_lea.sflag [#allocation4], 1
    %665 = vsyncpa %s664, 1
    %666 = vsyncpa [#allocation7], 1
    %s667 = scalar_lea.sflag [#allocation7], 1
    %668 = vsyncpa %s667, 1

</llo_original>
